<compile_context>
chip_gen: v5e
topology: v5e:2x2
jax: 0.10.0
libtpu: 0.0.40
codegen_flags: <defaults>
</compile_context>

<pallas_src>
import jax
import jax.numpy as jnp
from jax.experimental import pallas as pl
from jax.experimental.pallas import tpu as pltpu


def _make_focal_loss_kernel(alpha, gamma, n_rows, tile_n):
    alpha = float(alpha)
    gamma = float(gamma)

    def _focal_weight(w):
        # (1 - pt) ** gamma.  Integer gamma -> repeated VPU multiplies (safe at w == 0).
        if gamma == int(gamma) and gamma >= 0.0:
            g = int(gamma)
            if g == 0:
                return jnp.ones_like(w)
            out = w
            for _ in range(g - 1):
                out = out * w
            return out
        # Non-integer gamma: pow lowers to exp(g*log(w)); clamp away log(0).
        return jnp.power(jnp.maximum(w, jnp.float32(1e-30)), jnp.float32(gamma))

    def kernel(logits_ref, targets_ref, out_ref):
        i = pl.program_id(0)

        @pl.when(i == 0)
        def _():
            out_ref[0, 0] = jnp.float32(0.0)

        x = logits_ref[...].astype(jnp.float32)          # (TILE_N, C)
        t = targets_ref[...]                              # (TILE_N, 1) int32

        # --- softmax over classes (dim=1) ---
        x_max = jnp.max(x, axis=1, keepdims=True)
        ex = jnp.exp(x - x_max)
        denom = jnp.sum(ex, axis=1, keepdims=True)
        p = ex * pl.reciprocal(denom)                     # (TILE_N, C)

        # --- CrossEntropyLoss(reduction='none') applied to p ---
        # ce = logsumexp(p) - p[target]; p in [0, 1] so exp(p) cannot overflow,
        # hence no max subtraction in this second log-softmax.
        lse = jnp.log(jnp.sum(jnp.exp(p), axis=1, keepdims=True))       # (TILE_N, 1)
        class_ids = jax.lax.broadcasted_iota(jnp.int32, p.shape, 1)     # (TILE_N, C)
        p_t = jnp.sum(jnp.where(class_ids == t, p, 0.0), axis=1, keepdims=True)
        ce = lse - p_t                                    # (TILE_N, 1)

        # --- focal weighting ---
        pt = jnp.exp(-ce)
        focal = alpha * _focal_weight(1.0 - pt) * ce      # (TILE_N, 1)

        # Mask rows of the partial trailing block (only compiled in when needed).
        # Garbage/stale rows of a partial input block can produce NaN, but
        # jnp.where never propagates from the unselected branch -> exact 0.0.
        if n_rows % tile_n != 0:
            row = i * tile_n + jax.lax.broadcasted_iota(jnp.int32, focal.shape, 0)
            focal = jnp.where(row < n_rows, focal, 0.0)

        out_ref[0, 0] += jnp.sum(focal)

        @pl.when(i == pl.num_programs(0) - 1)
        def _():
            out_ref[0, 0] = out_ref[0, 0] * jnp.float32(1.0 / n_rows)

    return kernel


def focal_loss(logits, targets, num_classes, alpha=1.0, gamma=2.0,
               tile_bytes=4 << 20):
    """logits: (N, C) float; targets: (N,) int class indices. Returns scalar f32."""
    N, C = logits.shape
    assert C == num_classes
    itemsize = jnp.dtype(logits.dtype).itemsize

    # Row budget: ~tile_bytes of logits per block so the double-buffered input
    # pipeline fits the scoped-VMEM default on v5e/v6e/v7x alike.
    max_rows = max(8, (tile_bytes // max(1, C * itemsize)) // 8 * 8)
    max_rows = min(max_rows, 8192)

    if N <= max_rows:
        tile_n = N            # full-extent block: no (8,128) constraint, no masking
        num_tiles = 1
    else:
        tile_n = max_rows     # multiple of 8; last block may be partial (masked)
        num_tiles = pl.cdiv(N, tile_n)

    targets2d = targets.astype(jnp.int32).reshape(N, 1)
    kernel = _make_focal_loss_kernel(alpha, gamma, N, tile_n)

    cost = pl.CostEstimate(
        flops=8 * N * C,
        transcendentals=2 * N * C + 3 * N,
        bytes_accessed=N * C * itemsize + N * 4 + 4,
    )

    out = pl.pallas_call(
        kernel,
        out_shape=jax.ShapeDtypeStruct((1, 1), jnp.float32),
        grid=(num_tiles,),
        in_specs=[
            pl.BlockSpec((tile_n, C), lambda i: (i, 0)),   # row-tiled logits
            pl.BlockSpec((tile_n, 1), lambda i: (i, 0)),   # row-tiled targets
        ],
        # Scalar accumulator lives in SMEM; same block every step => resident carry.
        out_specs=pl.BlockSpec(memory_space=pltpu.SMEM),
        compiler_params=pltpu.CompilerParams(
            dimension_semantics=("arbitrary",)),           # carried accumulator
        cost_estimate=cost,
    )(logits, targets2d)
    return out[0, 0]


if __name__ == "__main__":
    # Deterministic small example: batch=8, num_classes=32
    N, C = 8, 32
    key = jax.random.PRNGKey(0)
    k_logits, k_targets = jax.random.split(key)
    logits = jax.random.normal(k_logits, (N, C), dtype=jnp.float32)
    targets = jax.random.randint(k_targets, (N,), 0, C, dtype=jnp.int32)

    loss = focal_loss(logits, targets, num_classes=C, alpha=1.0, gamma=2.0)
    jax.block_until_ready(loss)

    # Pure-JAX reference (same double-softmax semantics as the PyTorch module)
    p = jax.nn.softmax(logits, axis=1)
    logq = jax.nn.log_softmax(p, axis=1)
    ce = -jnp.take_along_axis(logq, targets[:, None], axis=1)[:, 0]
    pt = jnp.exp(-ce)
    ref = jnp.mean(1.0 * (1.0 - pt) ** 2.0 * ce)

    assert jnp.allclose(loss, ref, rtol=1e-5, atol=1e-6), (loss, ref)
    print("KERNEL_OK")
</pallas_src>

<mosaic_0001>
module attributes {stable_mosaic.version = 11 : i64} {
  func.func @kernel(%arg0: i32, %arg1: memref<8x32xf32, #tpu.memory_space<vmem>>, %arg2: memref<8x1xi32, #tpu.memory_space<vmem>>, %arg3: memref<1x1xf32, #tpu.memory_space<smem>>) attributes {dimension_semantics = [#tpu.dimension_semantics<arbitrary>], iteration_bounds = array<i64: 1>, scalar_prefetch = 0 : i64, scratch_operands = 0 : i64, tpu.core_type = #tpu.core_type<tc>, window_params = [{transform_indices = @transform_0, window_bounds = array<i64: 8, 32>}, {transform_indices = @transform_1, window_bounds = array<i64: 8, 1>}, {transform_indices = @transform_2, window_bounds = array<i64: 1, 1>}]} {
    %c0_i32 = arith.constant 0 : i32
    %0 = arith.cmpi eq, %arg0, %c0_i32 : i32
    %1 = arith.extui %0 : i1 to i32
    %c0_i32_0 = arith.constant 0 : i32
    %2 = arith.cmpi ne, %1, %c0_i32_0 : i32
    scf.if %2 {
      %cst_18 = arith.constant 0.000000e+00 : f32
      %c0_19 = arith.constant 0 : index
      %c0_20 = arith.constant 0 : index
      %46 = memref.load %arg3[%c0_19, %c0_20] : memref<1x1xf32, #tpu.memory_space<smem>>
      memref.store %cst_18, %arg3[%c0_19, %c0_20] : memref<1x1xf32, #tpu.memory_space<smem>>
    } else {
    }
    %c0 = arith.constant 0 : index
    %c0_1 = arith.constant 0 : index
    %3 = vector.load %arg1[%c0, %c0_1] : memref<8x32xf32, #tpu.memory_space<vmem>>, vector<8x32xf32>
    %c0_2 = arith.constant 0 : index
    %c0_3 = arith.constant 0 : index
    %4 = vector.load %arg2[%c0_2, %c0_3] : memref<8x1xi32, #tpu.memory_space<vmem>>, vector<8x1xi32>
    %cst = arith.constant dense<0xFF800000> : vector<8xf32>
    %5 = vector.multi_reduction <maximumf>, %3, %cst [1] : vector<8x32xf32> to vector<8xf32>
    %6 = vector.shape_cast %5 : vector<8xf32> to vector<8x1xf32>
    %7 = vector.broadcast %6 : vector<8x1xf32> to vector<8x32xf32>
    %8 = arith.subf %3, %7 : vector<8x32xf32>
    %9 = math.exp %8 : vector<8x32xf32>
    %cst_4 = arith.constant dense<0.000000e+00> : vector<8xf32>
    %10 = vector.multi_reduction <add>, %9, %cst_4 [1] : vector<8x32xf32> to vector<8xf32>
    %11 = vector.shape_cast %10 : vector<8xf32> to vector<8x1xf32>
    %12 = tpu.reciprocal %11 : vector<8x1xf32> -> vector<8x1xf32>
    %13 = vector.broadcast %12 : vector<8x1xf32> to vector<8x32xf32>
    %14 = arith.mulf %9, %13 : vector<8x32xf32>
    %15 = math.exp %14 : vector<8x32xf32>
    %cst_5 = arith.constant dense<0.000000e+00> : vector<8xf32>
    %16 = vector.multi_reduction <add>, %15, %cst_5 [1] : vector<8x32xf32> to vector<8xf32>
    %17 = vector.shape_cast %16 : vector<8xf32> to vector<8x1xf32>
    %18 = math.log %17 : vector<8x1xf32>
    %19 = tpu.iota {dimensions = array<i32: 1>} : vector<8x32xi32>
    %20 = vector.broadcast %4 : vector<8x1xi32> to vector<8x32xi32>
    %21 = arith.cmpi eq, %19, %20 : vector<8x32xi32>
    %cst_6 = arith.constant 0.000000e+00 : f32
    %22 = vector.broadcast %cst_6 : f32 to vector<8x32xf32>
    %23 = arith.select %21, %14, %22 : vector<8x32xi1>, vector<8x32xf32>
    %cst_7 = arith.constant dense<0.000000e+00> : vector<8xf32>
    %24 = vector.multi_reduction <add>, %23, %cst_7 [1] : vector<8x32xf32> to vector<8xf32>
    %25 = vector.shape_cast %24 : vector<8xf32> to vector<8x1xf32>
    %26 = arith.subf %18, %25 : vector<8x1xf32>
    %cst_8 = arith.constant 0.000000e+00 : f32
    %27 = vector.broadcast %cst_8 : f32 to vector<8x1xf32>
    %28 = arith.subf %27, %26 : vector<8x1xf32>
    %29 = math.exp %28 : vector<8x1xf32>
    %cst_9 = arith.constant 1.000000e+00 : f32
    %30 = vector.broadcast %cst_9 : f32 to vector<8x1xf32>
    %31 = arith.subf %30, %29 : vector<8x1xf32>
    %32 = arith.mulf %31, %31 : vector<8x1xf32>
    %cst_10 = arith.constant 1.000000e+00 : f32
    %33 = vector.broadcast %cst_10 : f32 to vector<8x1xf32>
    %34 = arith.mulf %33, %32 : vector<8x1xf32>
    %35 = arith.mulf %34, %26 : vector<8x1xf32>
    %c0_11 = arith.constant 0 : index
    %c0_12 = arith.constant 0 : index
    %36 = memref.load %arg3[%c0_11, %c0_12] : memref<1x1xf32, #tpu.memory_space<smem>>
    %37 = vector.shape_cast %35 : vector<8x1xf32> to vector<1x8x1xf32>
    %cst_13 = arith.constant dense<0.000000e+00> : vector<1xf32>
    %38 = vector.multi_reduction <add>, %37, %cst_13 [1, 2] : vector<1x8x1xf32> to vector<1xf32>
    %39 = vector.shape_cast %38 : vector<1xf32> to vector<1x1x1xf32>
    %40 = vector.extract %39[0, 0, 0] : f32 from vector<1x1x1xf32>
    %41 = arith.addf %36, %40 : f32
    %c0_14 = arith.constant 0 : index
    %c0_15 = arith.constant 0 : index
    %42 = memref.load %arg3[%c0_14, %c0_15] : memref<1x1xf32, #tpu.memory_space<smem>>
    memref.store %41, %arg3[%c0_14, %c0_15] : memref<1x1xf32, #tpu.memory_space<smem>>
    %c0_i32_16 = arith.constant 0 : i32
    %43 = arith.cmpi eq, %arg0, %c0_i32_16 : i32
    %44 = arith.extui %43 : i1 to i32
    %c0_i32_17 = arith.constant 0 : i32
    %45 = arith.cmpi ne, %44, %c0_i32_17 : i32
    scf.if %45 {
      %c0_18 = arith.constant 0 : index
      %c0_19 = arith.constant 0 : index
      %46 = memref.load %arg3[%c0_18, %c0_19] : memref<1x1xf32, #tpu.memory_space<smem>>
      %cst_20 = arith.constant 1.250000e-01 : f32
      %47 = arith.mulf %46, %cst_20 : f32
      %c0_21 = arith.constant 0 : index
      %c0_22 = arith.constant 0 : index
      %48 = memref.load %arg3[%c0_21, %c0_22] : memref<1x1xf32, #tpu.memory_space<smem>>
      memref.store %47, %arg3[%c0_21, %c0_22] : memref<1x1xf32, #tpu.memory_space<smem>>
    } else {
    }
    return
  }
  func.func @transform_0(%arg0: i32) -> (i32, i32) {
    %c0_i32 = arith.constant 0 : i32
    %c0_i32_0 = arith.constant 0 : i32
    return %arg0, %c0_i32 : i32, i32
  }
  func.func @transform_1(%arg0: i32) -> (i32, i32) {
    %c0_i32 = arith.constant 0 : i32
    %c0_i32_0 = arith.constant 0 : i32
    return %arg0, %c0_i32 : i32, i32
  }
  func.func @transform_2(%arg0: i32) -> (i32, i32) {
    %c0_i32 = arith.constant 0 : i32
    %c0_i32_0 = arith.constant 0 : i32
    %c0_i32_1 = arith.constant 0 : i32
    return %c0_i32, %c0_i32_0 : i32, i32
  }
}

</mosaic_0001>

<llo_original>
// kernel: tpu_custom_call.1
$region0: #{tpu_custom_call.1}
  #allocation0 [shape = 'u32[]', space=smem, size = 0x4, offset = 0x4, fixed_abs, tag = 'smem constant byte address 0x4 - core index']
  #allocation1 [shape = 'u32[72,128]{1,0:T(1,128)}', space=vmem, size = 0x9000, scoped, tag = 'internal scratch']
  %s0 = inlined_call_operand.vmem [shape: f32[8,32], index: 0, kind: input, shape index: {}]
  %s1 = inlined_call_operand.vmem [shape: s32[8,1], index: 1, kind: input, shape index: {}]
  %s2 = inlined_call_operand.hbm [shape: f32[1,1], index: 2, kind: output, shape index: {}]
  %s3 = sld [smem:[#allocation0]]
  $region26: #{tpu_custom_call.1} parent=0
    _
  %s5 = ssub.s32 1, %s3
  %s6 = scalar_select 0, %s5, %s3
  $region1: #{tpu_custom_call.1} parent=0
    #allocation2 [shape = 'u8[512]{0}', space=smem, size = 0x200, scoped, tag = 'output window, operand 0, single buffered']
    #allocation3 [shape = 's32[1]{0}', space=sflag, size = 0x4, scoped, tag = 'scoped memory for tpu_custom_call.1']
    %7 = vsyncpa [#allocation3], 0
    // Predicated region
    $region2: #{tpu_custom_call.1} parent=1 // pred_check
      _
    $region3: #{tpu_custom_call.1} parent=1 // pred_check_branch
      %9 = sbr.rel (0) target = $region5
    $region4: #{tpu_custom_call.1} parent=1 // pred_region
      _
    $region5: #{tpu_custom_call.1} parent=1 // pred_fallthru
      _
    // Predicated region
    $region6: #{tpu_custom_call.1} parent=1 // pred_check
      _
    $region7: #{tpu_custom_call.1} parent=1 // pred_check_branch
      %11 = sbr.rel (0) target = $region9
    $region8: #{tpu_custom_call.1} parent=1 // pred_region
      _
    $region9: #{tpu_custom_call.1} parent=1 // pred_fallthru
      _
    %p12 = scmp.eq.s32.totalorder 0, 0
    // Predicated region
    $region10: #{tpu_custom_call.1} parent=1 // pred_check
      %p13 = pneg %p12
    $region11: #{tpu_custom_call.1} parent=1 // pred_check_branch
      %15 = sbr.rel (%p13) target = $region13
    $region12: #{tpu_custom_call.1} parent=1 // pred_region
      %s16 = scalar_lea.smem [#allocation2], 0
      %17 = sst [smem:[%s16]] 0.0
    $region13: #{tpu_custom_call.1} parent=1 // pred_fallthru
      _
    %v18 = vld [vmem:[%s0] sm:$0xff]
    %v19 = vld [vmem:[%s1] sm:$0xff]
    %vm20 = vcmask 261120
    %v21 = vsel %vm20, %v18, -inf
    %22 = vmax.xlane.f32.xlu0 %v21
    %v23 = vpop.xlane.xlu0 %22
    %v24 = vsub.f32 %v18, %v23
    %v25 = vmul.f32 %v24, 1.442695
    %v26 = vpow.pop %v25
    %v27 = vsel %vm20, %v26, 0.0
    %28 = vadd.xlane.f32.xlu0 %v27
    %v29 = vpop.xlane.xlu0 %28
    %v30 = vrcp.pop %v29
    %v31 = vmul.f32 %v29, %v30
    %v32 = vsub.f32 1.0, %v31
    %v33 = vmul.f32 %v30, %v32
    %v34 = vadd.f32 %v30, %v33
    %vm35 = vweird.f32 %v29
    %vm36 = vweird.f32 %v30
    %vm37 = vmor %vm35, %vm36
    %v38 = vsel %vm37, %v30, %v34
    %v39 = vand.u32 2147483647, %v29
    %vm40 = vcmp.eq.f32.partialorder %v39, 8.507059e+37
    %v41 = vand.u32 %v29, 2147483648
    %v42 = vor.u32 1.1754944e-38, %v41
    %v43 = vsel %vm40, %v42, %v38
    %v44 = vmul.f32 %v26, %v43
    %v45 = vmul.f32 %v44, 1.442695
    %v46 = vpow.pop %v45
    %v47 = vsel %vm20, %v46, 0.0
    %48 = vadd.xlane.f32.xlu0 %v47
    %v49 = vpop.xlane.xlu0 %48
    %v50 = vlog2.pop %v49
    %v51 = vmul.f32 %v50, 0.6931472
    %v52 = vlaneseq
    %v53 = vand.u32 %v52, 127
    %54 = vset.pattern.permute.xlu0 0
    %55 = vperm.xlu0 %54, %v19
    %v56 = vpop.permute.xlu0 %55
    %vm57 = vcmp.eq.s32.totalorder %v53, %v56
    %v58 = vsel %vm57, %v44, 0.0
    %v59 = vsel %vm20, %v58, 0.0
    %60 = vadd.xlane.f32.xlu0 %v59
    %v61 = vpop.xlane.xlu0 %60
    %v62 = vsub.f32 %v51, %v61
    %v63 = vsub.f32 0.0, %v62
    %v64 = vmul.f32 %v63, 1.442695
    %v65 = vpow.pop %v64
    %v66 = vsub.f32 1.0, %v65
    %v67 = vmul.f32 %v66, %v66
    %v68 = vmul.f32 %v67, %v62
    %s69 = sld [smem:[#allocation2]]
    %vm70 = vcmask 7168
    %v71 = vsel %vm70, %v68, 0.0
    %72 = vadd.xlane.f32.xlu0 %v71
    %v73 = vpop.xlane.xlu0 %72
    %v74 = vrot.slane %v73, 4
    %v75 = vadd.f32 %v73, %v74
    %v76 = vrot.slane %v75, 2
    %v77 = vadd.f32 %v75, %v76
    %v78 = vrot.slane %v77, 1
    %v79 = vadd.f32 %v77, %v78
    %s80 = vtos %v79
    %s81 = sadd.f32 %s69, %s80
    %s82 = scalar_lea.smem [#allocation2], 0
    %83 = sst [smem:[%s82]] %s81
    // Predicated region
    $region14: #{tpu_custom_call.1} parent=1 // pred_check
      %p84 = pneg %p12
    $region15: #{tpu_custom_call.1} parent=1 // pred_check_branch
      %86 = sbr.rel (%p84) target = $region17
    $region16: #{tpu_custom_call.1} parent=1 // pred_region
      %s87 = sld [smem:[#allocation2]]
      %s88 = smul.f32 %s87, 0.125
      %89 = sst [smem:[%s82]] %s88
    $region17: #{tpu_custom_call.1} parent=1 // pred_fallthru
      _
    // Predicated region
    $region18: #{tpu_custom_call.1} parent=1 // pred_check
      _
    $region19: #{tpu_custom_call.1} parent=1 // pred_check_branch
      %91 = sbr.rel (0) target = $region21
    $region20: #{tpu_custom_call.1} parent=1 // pred_region
      %93 = vsyncadd [#allocation3], 0
      %s95 = sshll.u32 %s2, 4
      %s96 = int_to_ptr.hbm [resolvable:$true] %s95
      %98 = dma.smem_to_hbm [#allocation2], 16, %s96, [#allocation3]
    $region21: #{tpu_custom_call.1} parent=1 // pred_fallthru
      _
    // Predicated region
    $region22: #{tpu_custom_call.1} parent=1 // pred_check
      _
    $region23: #{tpu_custom_call.1} parent=1 // pred_check_branch
      %100 = sbr.rel (0) target = $region25
    $region24: #{tpu_custom_call.1} parent=1 // pred_region
      %102 = dma.done [#allocation3], 16
    $region25: #{tpu_custom_call.1} parent=1 // pred_fallthru
      _
    %103 = sfence
    %104 = vsyncpa [#allocation3], 1

</llo_original>
